<compile_context>
chip_gen: v6e
topology: v6e:2x2x1
jax: 0.10.0
libtpu: 0.0.40
codegen_flags: <defaults>
</compile_context>

<pallas_src>
import jax
import jax.numpy as jnp
from jax.experimental import pallas as pl
from jax.experimental.pallas import tpu as pltpu


def _ffn_kernel(x_ref, w1_ref, b1_ref, w2_ref, b2_ref, o_ref, acc_ref):
    # x_ref : (tm, dm_pad)      input rows (native dtype)
    # w1_ref: (dm_pad, tk)      W1 slice for this d_ff block
    # b1_ref: (1, tk)           b1 slice
    # w2_ref: (tk, dm_pad)      W2 slice for this d_ff block
    # b2_ref: (1, dm_pad)       b2 (full)
    # o_ref : (tm, dm_pad)      output rows
    # acc_ref: (tm, dm_pad) f32 accumulator (scratch, persists across d_ff steps)
    j = pl.program_id(1)

    # First matmul on the MXU: native-dtype operands, f32 accumulation.
    h = jnp.dot(x_ref[...], w1_ref[...], preferred_element_type=jnp.float32)
    h = jnp.maximum(h + b1_ref[...].astype(jnp.float32), 0.0)  # bias + ReLU (f32)
    # TODO(synk): training-mode dropout (pltpu.prng_*) not implemented; eval mode => identity.

    # Partial contribution of this d_ff slice to the output tile.
    part = jnp.dot(h.astype(w2_ref.dtype), w2_ref[...],
                   preferred_element_type=jnp.float32)

    @pl.when(j == 0)
    def _():
        acc_ref[...] = part + b2_ref[...].astype(jnp.float32)

    @pl.when(j != 0)
    def _():
        acc_ref[...] += part

    @pl.when(j == pl.num_programs(1) - 1)
    def _():
        o_ref[...] = acc_ref[...].astype(o_ref.dtype)


def _round_up(x, m):
    return (x + m - 1) // m * m


def positionwise_feed_forward(x, w1, b1, w2, b2, *, tm=256, tk=512):
    """x: (B, S, d_model). w1: (d_model, d_ff), b1: (d_ff,),
    w2: (d_ff, d_model), b2: (d_model,). Returns (B, S, d_model)."""
    B, S, d_model = x.shape
    d_ff = w1.shape[1]
    M = B * S

    # MXU-friendly tiles (multiples of 256 for v6e/v7x, >=128 everywhere),
    # clamped so tiny problems don't over-pad.
    tm = min(tm, _round_up(M, 256))
    tk = min(tk, _round_up(d_ff, 256))

    M_pad = _round_up(M, tm)            # handles M % tm != 0 via zero padding
    dm_pad = _round_up(d_model, 128)    # lane-dense input/output last dim
    dff_pad = _round_up(d_ff, tk)

    # Zero padding is exact: padded d_ff columns give relu(0)=0 and padded W2
    # rows/columns contribute 0; padded rows/columns are sliced off at the end.
    x2d = jnp.pad(x.reshape(M, d_model),
                  ((0, M_pad - M), (0, dm_pad - d_model)))
    w1p = jnp.pad(w1, ((0, dm_pad - d_model), (0, dff_pad - d_ff)))
    b1p = jnp.pad(b1, (0, dff_pad - d_ff)).reshape(1, dff_pad)
    w2p = jnp.pad(w2, ((0, dff_pad - d_ff), (0, dm_pad - d_model)))
    b2p = jnp.pad(b2, (0, dm_pad - d_model)).reshape(1, dm_pad)

    grid = (M_pad // tm, dff_pad // tk)

    nbytes = lambda a: int(a.size) * a.dtype.itemsize
    cost = pl.CostEstimate(
        flops=4 * M_pad * dm_pad * dff_pad,   # two matmuls, 2 flops/MAC
        transcendentals=0,
        bytes_accessed=(nbytes(x2d) + nbytes(w1p) + nbytes(b1p)
                        + nbytes(w2p) + nbytes(b2p)
                        + M_pad * dm_pad * x.dtype.itemsize),
    )

    out = pl.pallas_call(
        _ffn_kernel,
        out_shape=jax.ShapeDtypeStruct((M_pad, dm_pad), x.dtype),
        grid_spec=pltpu.PrefetchScalarGridSpec(
            num_scalar_prefetch=0,
            grid=grid,
            in_specs=[
                pl.BlockSpec((tm, dm_pad), lambda i, j: (i, 0)),    # x rows
                pl.BlockSpec((dm_pad, tk), lambda i, j: (0, j)),    # W1 d_ff slice
                pl.BlockSpec((1, tk), lambda i, j: (0, j)),         # b1 slice
                pl.BlockSpec((tk, dm_pad), lambda i, j: (j, 0)),    # W2 d_ff slice
                pl.BlockSpec((1, dm_pad), lambda i, j: (0, 0)),     # b2
            ],
            out_specs=pl.BlockSpec((tm, dm_pad), lambda i, j: (i, 0)),
            scratch_shapes=[pltpu.VMEM((tm, dm_pad), jnp.float32)],
        ),
        compiler_params=pltpu.CompilerParams(
            dimension_semantics=("parallel", "arbitrary"),
            vmem_limit_bytes=48 * 1024 * 1024,
        ),
        cost_estimate=cost,
    )(x2d, w1p, b1p, w2p, b2p)

    return out[:M, :d_model].reshape(B, S, d_model)


if __name__ == "__main__":
    # Small shapes consistent with the module: batch=2, seq=8, d_model=32, d_ff=64.
    B, S, d_model, d_ff = 2, 8, 32, 64

    key = jax.random.PRNGKey(0)
    kx, kw1, kb1, kw2, kb2 = jax.random.split(key, 5)

    x = jax.random.normal(kx, (B, S, d_model), dtype=jnp.float32)

    # (PyTorch Linear stores weight as (out, in); we keep the math-friendly
    # (in, out) layout for the kernel.)
    w1 = jax.random.normal(kw1, (d_model, d_ff), dtype=jnp.float32) * 0.1
    b1 = jax.random.normal(kb1, (d_ff,), dtype=jnp.float32) * 0.1
    w2 = jax.random.normal(kw2, (d_ff, d_model), dtype=jnp.float32) * 0.1
    b2 = jax.random.normal(kb2, (d_model,), dtype=jnp.float32) * 0.1

    y = positionwise_feed_forward(x, w1, b1, w2, b2)
    jax.block_until_ready(y)

    # Pure-JAX reference check
    ref = jnp.maximum(x @ w1 + b1, 0.0) @ w2 + b2
    assert y.shape == (B, S, d_model)
    assert jnp.allclose(y, ref, atol=1e-4, rtol=1e-4), \
        float(jnp.max(jnp.abs(y - ref)))

    print("KERNEL_OK")
</pallas_src>

<mosaic_0001>
module attributes {stable_mosaic.version = 11 : i64} {
  func.func @_ffn_kernel(%arg0: i32, %arg1: i32, %arg2: memref<256x128xf32, #tpu.memory_space<vmem>>, %arg3: memref<128x256xf32, #tpu.memory_space<vmem>>, %arg4: memref<1x256xf32, #tpu.memory_space<vmem>>, %arg5: memref<256x128xf32, #tpu.memory_space<vmem>>, %arg6: memref<1x128xf32, #tpu.memory_space<vmem>>, %arg7: memref<256x128xf32, #tpu.memory_space<vmem>>, %arg8: memref<256x128xf32, #tpu.memory_space<vmem>>) attributes {dimension_semantics = [#tpu.dimension_semantics<parallel>, #tpu.dimension_semantics<arbitrary>], iteration_bounds = array<i64: 1, 1>, scalar_prefetch = 0 : i64, scratch_operands = 1 : i64, tpu.core_type = #tpu.core_type<tc>, window_params = [{transform_indices = @transform_0, window_bounds = array<i64: 256, 128>}, {transform_indices = @transform_1, window_bounds = array<i64: 128, 256>}, {transform_indices = @transform_2, window_bounds = array<i64: 1, 256>}, {transform_indices = @transform_3, window_bounds = array<i64: 256, 128>}, {pipeline_mode = #tpu.pipeline_mode<synchronous>, transform_indices = @transform_4, window_bounds = array<i64: 1, 128>}, {transform_indices = @transform_5, window_bounds = array<i64: 256, 128>}]} {
    %c0 = arith.constant 0 : index
    %c0_0 = arith.constant 0 : index
    %0 = vector.load %arg2[%c0, %c0_0] : memref<256x128xf32, #tpu.memory_space<vmem>>, vector<256x128xf32>
    %c0_1 = arith.constant 0 : index
    %c0_2 = arith.constant 0 : index
    %1 = vector.load %arg3[%c0_1, %c0_2] : memref<128x256xf32, #tpu.memory_space<vmem>>, vector<128x256xf32>
    %cst = arith.constant dense<0.000000e+00> : vector<256x256xf32>
    %2 = tpu.matmul %0, %1, %cst {dimension_numbers = #tpu.dot_dimension_numbers<[1], [0], [0], [1], [0, 0, 1, 1], [], []>} : vector<256x128xf32>, vector<128x256xf32>, vector<256x256xf32> -> vector<256x256xf32>
    %c0_3 = arith.constant 0 : index
    %c0_4 = arith.constant 0 : index
    %3 = vector.load %arg4[%c0_3, %c0_4] : memref<1x256xf32, #tpu.memory_space<vmem>>, vector<1x256xf32>
    %4 = vector.broadcast %3 : vector<1x256xf32> to vector<256x256xf32>
    %5 = arith.addf %2, %4 : vector<256x256xf32>
    %cst_5 = arith.constant 0.000000e+00 : f32
    %6 = vector.broadcast %cst_5 : f32 to vector<256x256xf32>
    %7 = arith.maximumf %5, %6 : vector<256x256xf32>
    %c0_6 = arith.constant 0 : index
    %c0_7 = arith.constant 0 : index
    %8 = vector.load %arg5[%c0_6, %c0_7] : memref<256x128xf32, #tpu.memory_space<vmem>>, vector<256x128xf32>
    %cst_8 = arith.constant dense<0.000000e+00> : vector<256x128xf32>
    %9 = tpu.matmul %7, %8, %cst_8 {dimension_numbers = #tpu.dot_dimension_numbers<[1], [0], [0], [1], [0, 0, 1, 1], [], []>} : vector<256x256xf32>, vector<256x128xf32>, vector<256x128xf32> -> vector<256x128xf32>
    %c0_i32 = arith.constant 0 : i32
    %10 = arith.cmpi eq, %arg1, %c0_i32 : i32
    %11 = arith.extui %10 : i1 to i32
    %c0_i32_9 = arith.constant 0 : i32
    %12 = arith.cmpi ne, %11, %c0_i32_9 : i32
    scf.if %12 {
      %c0_14 = arith.constant 0 : index
      %c0_15 = arith.constant 0 : index
      %19 = vector.load %arg6[%c0_14, %c0_15] : memref<1x128xf32, #tpu.memory_space<vmem>>, vector<1x128xf32>
      %20 = vector.broadcast %19 : vector<1x128xf32> to vector<256x128xf32>
      %21 = arith.addf %9, %20 : vector<256x128xf32>
      %c0_16 = arith.constant 0 : index
      %c0_17 = arith.constant 0 : index
      %22 = vector.load %arg8[%c0_16, %c0_17] : memref<256x128xf32, #tpu.memory_space<vmem>>, vector<256x128xf32>
      tpu.vector_store %arg8[%c0_16, %c0_17], %21 {strides = array<i32>} : memref<256x128xf32, #tpu.memory_space<vmem>>, vector<256x128xf32>,
    } else {
    }
    %c0_i32_10 = arith.constant 0 : i32
    %13 = arith.cmpi ne, %arg1, %c0_i32_10 : i32
    %14 = arith.extui %13 : i1 to i32
    %c0_i32_11 = arith.constant 0 : i32
    %15 = arith.cmpi ne, %14, %c0_i32_11 : i32
    scf.if %15 {
      %c0_14 = arith.constant 0 : index
      %c0_15 = arith.constant 0 : index
      %19 = vector.load %arg8[%c0_14, %c0_15] : memref<256x128xf32, #tpu.memory_space<vmem>>, vector<256x128xf32>
      %20 = arith.addf %19, %9 : vector<256x128xf32>
      %c0_16 = arith.constant 0 : index
      %c0_17 = arith.constant 0 : index
      %21 = vector.load %arg8[%c0_16, %c0_17] : memref<256x128xf32, #tpu.memory_space<vmem>>, vector<256x128xf32>
      tpu.vector_store %arg8[%c0_16, %c0_17], %20 {strides = array<i32>} : memref<256x128xf32, #tpu.memory_space<vmem>>, vector<256x128xf32>,
    } else {
    }
    %c0_i32_12 = arith.constant 0 : i32
    %16 = arith.cmpi eq, %arg1, %c0_i32_12 : i32
    %17 = arith.extui %16 : i1 to i32
    %c0_i32_13 = arith.constant 0 : i32
    %18 = arith.cmpi ne, %17, %c0_i32_13 : i32
    scf.if %18 {
      %c0_14 = arith.constant 0 : index
      %c0_15 = arith.constant 0 : index
      %19 = vector.load %arg8[%c0_14, %c0_15] : memref<256x128xf32, #tpu.memory_space<vmem>>, vector<256x128xf32>
      %c0_16 = arith.constant 0 : index
      %c0_17 = arith.constant 0 : index
      %20 = vector.load %arg7[%c0_16, %c0_17] : memref<256x128xf32, #tpu.memory_space<vmem>>, vector<256x128xf32>
      tpu.vector_store %arg7[%c0_16, %c0_17], %19 {strides = array<i32>} : memref<256x128xf32, #tpu.memory_space<vmem>>, vector<256x128xf32>,
    } else {
    }
    return
  }
  func.func @transform_0(%arg0: i32, %arg1: i32) -> (i32, i32) {
    %c0_i32 = arith.constant 0 : i32
    %c0_i32_0 = arith.constant 0 : i32
    return %arg0, %c0_i32 : i32, i32
  }
  func.func @transform_1(%arg0: i32, %arg1: i32) -> (i32, i32) {
    %c0_i32 = arith.constant 0 : i32
    %c0_i32_0 = arith.constant 0 : i32
    return %c0_i32, %arg1 : i32, i32
  }
  func.func @transform_2(%arg0: i32, %arg1: i32) -> (i32, i32) {
    %c0_i32 = arith.constant 0 : i32
    %c0_i32_0 = arith.constant 0 : i32
    return %c0_i32, %arg1 : i32, i32
  }
  func.func @transform_3(%arg0: i32, %arg1: i32) -> (i32, i32) {
    %c0_i32 = arith.constant 0 : i32
    %c0_i32_0 = arith.constant 0 : i32
    return %arg1, %c0_i32 : i32, i32
  }
  func.func @transform_4(%arg0: i32, %arg1: i32) -> (i32, i32) {
    %c0_i32 = arith.constant 0 : i32
    %c0_i32_0 = arith.constant 0 : i32
    %c0_i32_1 = arith.constant 0 : i32
    return %c0_i32, %c0_i32_0 : i32, i32
  }
  func.func @transform_5(%arg0: i32, %arg1: i32) -> (i32, i32) {
    %c0_i32 = arith.constant 0 : i32
    %c0_i32_0 = arith.constant 0 : i32
    return %arg0, %c0_i32 : i32, i32
  }
}

</mosaic_0001>

<llo_original>
// kernel: tpu_custom_call.1
$region0: #{tpu_custom_call.1}
  #allocation0 [shape = 'u32[]', space=smem, size = 0x4, offset = 0x4, fixed_abs, tag = 'smem constant byte address 0x4 - core index']
  #allocation1 [shape = 'u32[144,128]{1,0:T(1,128)}', space=vmem, size = 0x12000, scoped, tag = 'internal scratch']
  #allocation2 [shape = 'f32[256,128]{1,0:T(8,128)}', space=vmem, size = 0x20000, scoped, tag = 'scratch operand']
  %s0 = inlined_call_operand.hbm [shape: f32[256,128], index: 0, kind: input, shape index: {}]
  %s1 = inlined_call_operand.hbm [shape: f32[128,256], index: 1, kind: input, shape index: {}]
  %s2 = inlined_call_operand.vmem [shape: f32[1,256], index: 2, kind: input, shape index: {}]
  %s3 = inlined_call_operand.hbm [shape: f32[256,128], index: 3, kind: input, shape index: {}]
  %s4 = inlined_call_operand.vmem [shape: f32[1,128], index: 4, kind: input, shape index: {}]
  %s5 = inlined_call_operand.hbm [shape: f32[256,128], index: 5, kind: output, shape index: {}]
  %s6 = sld [smem:[#allocation0]]
  $region54: #{tpu_custom_call.1} parent=0
    _
  %s8 = ssub.s32 1, %s6
  %s9 = scalar_select 0, %s8, %s6
  $region1: #{tpu_custom_call.1} parent=0
    #allocation3 [shape = 'u8[131072]{0}', space=vmem, size = 0x20000, scoped, tag = 'input window, operand 0, single buffered']
    #allocation4 [shape = 's32[1]{0}', space=sflag, size = 0x4, scoped, tag = 'scoped memory for tpu_custom_call.1']
    #allocation5 [shape = 's32[1]{0}', space=sflag, size = 0x4, scoped, tag = 'scoped memory for tpu_custom_call.1']
    #allocation6 [shape = 'u8[131072]{0}', space=vmem, size = 0x20000, scoped, tag = 'input window, operand 1, single buffered']
    #allocation7 [shape = 's32[1]{0}', space=sflag, size = 0x4, scoped, tag = 'scoped memory for tpu_custom_call.1']
    #allocation8 [shape = 'u8[131072]{0}', space=vmem, size = 0x20000, scoped, tag = 'input window, operand 3, single buffered']
    #allocation9 [shape = 'u8[131072]{0}', space=vmem, size = 0x20000, scoped, tag = 'output window, operand 0, single buffered']
    %10 = vsyncpa [#allocation4], 0
    %11 = vsyncpa [#allocation7], 0
    %12 = vsyncpa [#allocation5], 0
    // Predicated region
    $region2: #{tpu_custom_call.1} parent=1 // pred_check
      _
    $region3: #{tpu_custom_call.1} parent=1 // pred_check_branch
      %14 = sbr.rel (0) target = $region5
    $region4: #{tpu_custom_call.1} parent=1 // pred_region
      %s16 = ssub.s32 4096, 4096
      %17 = vsyncadd [#allocation4], %s16
      %s18 = sshll.u32 [#allocation3], 4
      %s19 = int_to_ptr.vmem [resolvable:$true] %s18
      %24 = dma.hbm_to_vmem [thread:$0]  %s0, 4096, %s19, [#allocation4], 128, 128, 8
    $region5: #{tpu_custom_call.1} parent=1 // pred_fallthru
      _
    // Predicated region
    $region6: #{tpu_custom_call.1} parent=1 // pred_check
      _
    $region7: #{tpu_custom_call.1} parent=1 // pred_check_branch
      %26 = sbr.rel (0) target = $region9
    $region8: #{tpu_custom_call.1} parent=1 // pred_region
      %s28 = ssub.s32 4096, 4096
      %29 = vsyncadd [#allocation7], %s28
      %s30 = sshll.u32 [#allocation6], 4
      %s31 = int_to_ptr.vmem [resolvable:$true] %s30
      %36 = dma.hbm_to_vmem [thread:$0]  %s1, 4096, %s31, [#allocation7], 256, 256, 16
    $region9: #{tpu_custom_call.1} parent=1 // pred_fallthru
      _
    // Predicated region
    $region10: #{tpu_custom_call.1} parent=1 // pred_check
      _
    $region11: #{tpu_custom_call.1} parent=1 // pred_check_branch
      %38 = sbr.rel (0) target = $region13
    $region12: #{tpu_custom_call.1} parent=1 // pred_region
      _
    $region13: #{tpu_custom_call.1} parent=1 // pred_fallthru
      _
    // Predicated region
    $region14: #{tpu_custom_call.1} parent=1 // pred_check
      _
    $region15: #{tpu_custom_call.1} parent=1 // pred_check_branch
      %40 = sbr.rel (0) target = $region17
    $region16: #{tpu_custom_call.1} parent=1 // pred_region
      %s42 = ssub.s32 4096, 4096
      %43 = vsyncadd [#allocation7], %s42
      %s44 = sshll.u32 [#allocation8], 4
      %s45 = int_to_ptr.vmem [resolvable:$true] %s44
      %50 = dma.hbm_to_vmem [thread:$0]  %s3, 4096, %s45, [#allocation7], 128, 128, 8
    $region17: #{tpu_custom_call.1} parent=1 // pred_fallthru
      _
    // Predicated region
    $region18: #{tpu_custom_call.1} parent=1 // pred_check
      _
    $region19: #{tpu_custom_call.1} parent=1 // pred_check_branch
      %52 = sbr.rel (0) target = $region21
    $region20: #{tpu_custom_call.1} parent=1 // pred_region
      _
    $region21: #{tpu_custom_call.1} parent=1 // pred_fallthru
      _
    // Predicated region
    $region22: #{tpu_custom_call.1} parent=1 // pred_check
      _
    $region23: #{tpu_custom_call.1} parent=1 // pred_check_branch
      %54 = sbr.rel (0) target = $region25
    $region24: #{tpu_custom_call.1} parent=1 // pred_region
      %55 = dma.done [#allocation4], 4096
    $region25: #{tpu_custom_call.1} parent=1 // pred_fallthru
      _
    // Predicated region
    $region26: #{tpu_custom_call.1} parent=1 // pred_check
      _
    $region27: #{tpu_custom_call.1} parent=1 // pred_check_branch
      %57 = sbr.rel (0) target = $region29
    $region28: #{tpu_custom_call.1} parent=1 // pred_region
      %58 = dma.done [#allocation7], 4096
    $region29: #{tpu_custom_call.1} parent=1 // pred_fallthru
      _
    // Predicated region
    $region30: #{tpu_custom_call.1} parent=1 // pred_check
      _
    $region31: #{tpu_custom_call.1} parent=1 // pred_check_branch
      %60 = sbr.rel (0) target = $region33
    $region32: #{tpu_custom_call.1} parent=1 // pred_region
      %61 = dma.done [#allocation7], 4096
    $region33: #{tpu_custom_call.1} parent=1 // pred_fallthru
      _
    %v62 = vld [vmem:[#allocation3] sm:$0xff]
    %v63 = vld [vmem:[#allocation3 + $0x8] sm:$0xff]
    %v64 = vld [vmem:[#allocation3 + $0x10] sm:$0xff]
    %v65 = vld [vmem:[#allocation3 + $0x18] sm:$0xff]
    %v66 = vld [vmem:[#allocation3 + $0x20] sm:$0xff]
    %v67 = vld [vmem:[#allocation3 + $0x28] sm:$0xff]
    %v68 = vld [vmem:[#allocation3 + $0x30] sm:$0xff]
    %v69 = vld [vmem:[#allocation3 + $0x38] sm:$0xff]
    %v70 = vld [vmem:[#allocation3 + $0x40] sm:$0xff]
    %v71 = vld [vmem:[#allocation3 + $0x48] sm:$0xff]
    %v72 = vld [vmem:[#allocation3 + $0x50] sm:$0xff]
    %v73 = vld [vmem:[#allocation3 + $0x58] sm:$0xff]
    %v74 = vld [vmem:[#allocation3 + $0x60] sm:$0xff]
    %v75 = vld [vmem:[#allocation3 + $0x68] sm:$0xff]
    %v76 = vld [vmem:[#allocation3 + $0x70] sm:$0xff]
    %v77 = vld [vmem:[#allocation3 + $0x78] sm:$0xff]
    %v78 = vld [vmem:[#allocation3 + $0x80] sm:$0xff]
    %v79 = vld [vmem:[#allocation3 + $0x88] sm:$0xff]
    %v80 = vld [vmem:[#allocation3 + $0x90] sm:$0xff]
    %v81 = vld [vmem:[#allocation3 + $0x98] sm:$0xff]
    %v82 = vld [vmem:[#allocation3 + $0xa0] sm:$0xff]
    %v83 = vld [vmem:[#allocation3 + $0xa8] sm:$0xff]
    %v84 = vld [vmem:[#allocation3 + $0xb0] sm:$0xff]
    %v85 = vld [vmem:[#allocation3 + $0xb8] sm:$0xff]
    %v86 = vld [vmem:[#allocation3 + $0xc0] sm:$0xff]
    %v87 = vld [vmem:[#allocation3 + $0xc8] sm:$0xff]
    %v88 = vld [vmem:[#allocation3 + $0xd0] sm:$0xff]
    %v89 = vld [vmem:[#allocation3 + $0xd8] sm:$0xff]
    %v90 = vld [vmem:[#allocation3 + $0xe0] sm:$0xff]
    %v91 = vld [vmem:[#allocation3 + $0xe8] sm:$0xff]
    %v92 = vld [vmem:[#allocation3 + $0xf0] sm:$0xff]
    %v93 = vld [vmem:[#allocation3 + $0xf8] sm:$0xff]
    %v94 = vld [vmem:[#allocation6] sm:$0xff]
    %v95 = vld [vmem:[#allocation6 + $0x8] sm:$0xff]
    %v96 = vld [vmem:[#allocation6 + $0x10] sm:$0xff]
    %v97 = vld [vmem:[#allocation6 + $0x18] sm:$0xff]
    %v98 = vld [vmem:[#allocation6 + $0x20] sm:$0xff]
    %v99 = vld [vmem:[#allocation6 + $0x28] sm:$0xff]
    %v100 = vld [vmem:[#allocation6 + $0x30] sm:$0xff]
    %v101 = vld [vmem:[#allocation6 + $0x38] sm:$0xff]
    %v102 = vld [vmem:[#allocation6 + $0x40] sm:$0xff]
    %v103 = vld [vmem:[#allocation6 + $0x48] sm:$0xff]
    %v104 = vld [vmem:[#allocation6 + $0x50] sm:$0xff]
    %v105 = vld [vmem:[#allocation6 + $0x58] sm:$0xff]
    %v106 = vld [vmem:[#allocation6 + $0x60] sm:$0xff]
    %v107 = vld [vmem:[#allocation6 + $0x68] sm:$0xff]
    %v108 = vld [vmem:[#allocation6 + $0x70] sm:$0xff]
    %v109 = vld [vmem:[#allocation6 + $0x78] sm:$0xff]
    %v110 = vld [vmem:[#allocation6 + $0x80] sm:$0xff]
    %v111 = vld [vmem:[#allocation6 + $0x88] sm:$0xff]
    %v112 = vld [vmem:[#allocation6 + $0x90] sm:$0xff]
    %v113 = vld [vmem:[#allocation6 + $0x98] sm:$0xff]
    %v114 = vld [vmem:[#allocation6 + $0xa0] sm:$0xff]
    %v115 = vld [vmem:[#allocation6 + $0xa8] sm:$0xff]
    %v116 = vld [vmem:[#allocation6 + $0xb0] sm:$0xff]
    %v117 = vld [vmem:[#allocation6 + $0xb8] sm:$0xff]
    %v118 = vld [vmem:[#allocation6 + $0xc0] sm:$0xff]
    %v119 = vld [vmem:[#allocation6 + $0xc8] sm:$0xff]
    %v120 = vld [vmem:[#allocation6 + $0xd0] sm:$0xff]
    %v121 = vld [vmem:[#allocation6 + $0xd8] sm:$0xff]
    %v122 = vld [vmem:[#allocation6 + $0xe0] sm:$0xff]
    %v123 = vld [vmem:[#allocation6 + $0xe8] sm:$0xff]
    %v124 = vld [vmem:[#allocation6 + $0xf0] sm:$0xff]
    %v125 = vld [vmem:[#allocation6 + $0xf8] sm:$0xff]
    %v126 = vld [vmem:[%s2] sm:$0x3]
    %v128 = vlaneseq
    %v129 = vshrl.u32 %v128, 7
    %v130 = vsub.s32 0, %v129
    %v131 = vrot.slane %v126, %v130
    %v132 = vlaneseq
    %v133 = vshrl.u32 %v132, 7
    %v134 = vsub.s32 1, %v133
    %v135 = vrot.slane %v126, %v134
    %138 = vmatprep.subr.mxu0 %v125
    %139 = vmatpush1.msra.mxu0 %v124
    %140 = vmatprep.subr.mxu0 %v123
    %141 = vmatpush1.msra.mxu0 %v122
    %142 = vmatprep.subr.mxu0 %v121
    %143 = vmatpush1.msra.mxu0 %v120
    %144 = vmatprep.subr.mxu0 %v119
    %145 = vmatpush1.msra.mxu0 %v118
    %146 = vmatprep.subr.mxu0 %v117
    %147 = vmatpush1.msra.mxu0 %v116
    %148 = vmatprep.subr.mxu0 %v115
    %149 = vmatpush1.msra.mxu0 %v114
    %150 = vmatprep.subr.mxu0 %v113
    %151 = vmatpush1.msra.mxu0 %v112
    %152 = vmatprep.subr.mxu0 %v111
    %153 = vmatpush1.msra.mxu0 %v110
    %154 = vmatprep.subr.mxu0 %v109
    %155 = vmatpush1.msra.mxu0 %v108
    %156 = vmatprep.subr.mxu0 %v107
    %157 = vmatpush1.msra.mxu0 %v106
    %158 = vmatprep.subr.mxu0 %v105
    %159 = vmatpush1.msra.mxu0 %v104
    %160 = vmatprep.subr.mxu0 %v103
    %161 = vmatpush1.msra.mxu0 %v102
    %162 = vmatprep.subr.mxu0 %v101
    %163 = vmatpush1.msra.mxu0 %v100
    %164 = vmatprep.subr.mxu0 %v99
    %165 = vmatpush1.msra.mxu0 %v98
    %166 = vmatprep.subr.mxu0 %v97
    %167 = vmatpush1.msra.mxu0 %v96
    %168 = vmatprep.subr.mxu0 %v95
    %169 = vmatpush1.msra.mxu0 %v94
    %170 = vmatprep.subr.mxu0 0.0
    %171 = vmatpush2.msra.mxu0 0.0
    %172 = vmatprep.subr.mxu0 0.0
    %173 = vmatpush2.msra.mxu0 0.0
    %174 = vmatprep.subr.mxu0 0.0
    %175 = vmatpush2.msra.mxu0 0.0
    %176 = vmatprep.subr.mxu0 0.0
    %177 = vmatpush2.msra.mxu0 0.0
    %178 = vmatprep.subr.mxu0 0.0
    %179 = vmatpush2.msra.mxu0 0.0
    %180 = vmatprep.subr.mxu0 0.0
    %181 = vmatpush2.msra.mxu0 0.0
    %182 = vmatprep.subr.mxu0 0.0
    %183 = vmatpush2.msra.mxu0 0.0
    %184 = vmatprep.subr.mxu0 0.0
    %185 = vmatpush2.msra.mxu0 0.0
    %186 = vmatprep.subr.mxu0 0.0
    %187 = vmatpush2.msra.mxu0 0.0
    %188 = vmatprep.subr.mxu0 0.0
    %189 = vmatpush2.msra.mxu0 0.0
    %190 = vmatprep.subr.mxu0 0.0
    %191 = vmatpush2.msra.mxu0 0.0
    %192 = vmatprep.subr.mxu0 0.0
    %193 = vmatpush2.msra.mxu0 0.0
    %194 = vmatprep.subr.mxu0 0.0
    %195 = vmatpush2.msra.mxu0 0.0
    %196 = vmatprep.subr.mxu0 0.0
    %197 = vmatpush2.msra.mxu0 0.0
    %198 = vmatprep.subr.mxu0 0.0
    %199 = vmatpush2.msra.mxu0 0.0
    %200 = vmatprep.subr.mxu0 0.0
    %201 = vmatpush2.msra.mxu0 0.0
    %202 = vmatprep.mubr.f32.mxu0 0.0
    %203 = vmatmul.mubr.f32.gmra.mxu0 %v62
    %v204 = vpop.f32.mrf.mxu0
    %v205 = vadd.f32 %v131, %v204
    %v206 = vpop.f32.mrf.mxu0
    %v207 = vadd.f32 %v135, %v206
    %208 = vmatprep.mubr.f32.mxu0 0.0
    %209 = vmatmul.mubr.f32.gmra.mxu0 %v63
    %v210 = vpop.f32.mrf.mxu0
    %v211 = vadd.f32 %v131, %v210
    %v212 = vpop.f32.mrf.mxu0
    %v213 = vadd.f32 %v135, %v212
    %214 = vmatprep.mubr.f32.mxu0 0.0
    %215 = vmatmul.mubr.f32.gmra.mxu0 %v64
    %v216 = vpop.f32.mrf.mxu0
    %v217 = vadd.f32 %v131, %v216
    %v218 = vpop.f32.mrf.mxu0
    %v219 = vadd.f32 %v135, %v218
    %220 = vmatprep.mubr.f32.mxu0 0.0
    %221 = vmatmul.mubr.f32.gmra.mxu0 %v65
    %v222 = vpop.f32.mrf.mxu0
    %v223 = vadd.f32 %v131, %v222
    %v224 = vpop.f32.mrf.mxu0
    %v225 = vadd.f32 %v135, %v224
    %226 = vmatprep.mubr.f32.mxu0 0.0
    %227 = vmatmul.mubr.f32.gmra.mxu0 %v66
    %v228 = vpop.f32.mrf.mxu0
    %v229 = vadd.f32 %v131, %v228
    %v230 = vpop.f32.mrf.mxu0
    %v231 = vadd.f32 %v135, %v230
    %232 = vmatprep.mubr.f32.mxu0 0.0
    %233 = vmatmul.mubr.f32.gmra.mxu0 %v67
    %v234 = vpop.f32.mrf.mxu0
    %v235 = vadd.f32 %v131, %v234
    %v236 = vpop.f32.mrf.mxu0
    %v237 = vadd.f32 %v135, %v236
    %238 = vmatprep.mubr.f32.mxu0 0.0
    %239 = vmatmul.mubr.f32.gmra.mxu0 %v68
    %v240 = vpop.f32.mrf.mxu0
    %v241 = vadd.f32 %v131, %v240
    %v242 = vpop.f32.mrf.mxu0
    %v243 = vadd.f32 %v135, %v242
    %244 = vmatprep.mubr.f32.mxu0 0.0
    %245 = vmatmul.mubr.f32.gmra.mxu0 %v69
    %v246 = vpop.f32.mrf.mxu0
    %v247 = vadd.f32 %v131, %v246
    %v248 = vpop.f32.mrf.mxu0
    %v249 = vadd.f32 %v135, %v248
    %250 = vmatprep.mubr.f32.mxu0 0.0
    %251 = vmatmul.mubr.f32.gmra.mxu0 %v70
    %v252 = vpop.f32.mrf.mxu0
    %v253 = vadd.f32 %v131, %v252
    %v254 = vpop.f32.mrf.mxu0
    %v255 = vadd.f32 %v135, %v254
    %256 = vmatprep.mubr.f32.mxu0 0.0
    %257 = vmatmul.mubr.f32.gmra.mxu0 %v71
    %v258 = vpop.f32.mrf.mxu0
    %v259 = vadd.f32 %v131, %v258
    %v260 = vpop.f32.mrf.mxu0
    %v261 = vadd.f32 %v135, %v260
    %262 = vmatprep.mubr.f32.mxu0 0.0
    %263 = vmatmul.mubr.f32.gmra.mxu0 %v72
    %v264 = vpop.f32.mrf.mxu0
    %v265 = vadd.f32 %v131, %v264
    %v266 = vpop.f32.mrf.mxu0
    %v267 = vadd.f32 %v135, %v266
    %268 = vmatprep.mubr.f32.mxu0 0.0
    %269 = vmatmul.mubr.f32.gmra.mxu0 %v73
    %v270 = vpop.f32.mrf.mxu0
    %v271 = vadd.f32 %v131, %v270
    %v272 = vpop.f32.mrf.mxu0
    %v273 = vadd.f32 %v135, %v272
    %274 = vmatprep.mubr.f32.mxu0 0.0
    %275 = vmatmul.mubr.f32.gmra.mxu0 %v74
    %v276 = vpop.f32.mrf.mxu0
    %v277 = vadd.f32 %v131, %v276
    %v278 = vpop.f32.mrf.mxu0
    %v279 = vadd.f32 %v135, %v278
    %280 = vmatprep.mubr.f32.mxu0 0.0
    %281 = vmatmul.mubr.f32.gmra.mxu0 %v75
    %v282 = vpop.f32.mrf.mxu0
    %v283 = vadd.f32 %v131, %v282
    %v284 = vpop.f32.mrf.mxu0
    %v285 = vadd.f32 %v135, %v284
    %286 = vmatprep.mubr.f32.mxu0 0.0
    %287 = vmatmul.mubr.f32.gmra.mxu0 %v76
    %v288 = vpop.f32.mrf.mxu0
    %v289 = vadd.f32 %v131, %v288
    %v290 = vpop.f32.mrf.mxu0
    %v291 = vadd.f32 %v135, %v290
    %292 = vmatprep.mubr.f32.mxu0 0.0
    %293 = vmatmul.mubr.f32.gmra.mxu0 %v77
    %v294 = vpop.f32.mrf.mxu0
    %v295 = vadd.f32 %v131, %v294
    %v296 = vpop.f32.mrf.mxu0
    %v297 = vadd.f32 %v135, %v296
    %298 = vmatprep.mubr.f32.mxu0 0.0
    %299 = vmatmul.mubr.f32.gmra.mxu0 %v78
    %v300 = vpop.f32.mrf.mxu0
    %v301 = vadd.f32 %v131, %v300
    %v302 = vpop.f32.mrf.mxu0
    %v303 = vadd.f32 %v135, %v302
    %304 = vmatprep.mubr.f32.mxu0 0.0
    %305 = vmatmul.mubr.f32.gmra.mxu0 %v79
    %v306 = vpop.f32.mrf.mxu0
    %v307 = vadd.f32 %v131, %v306
    %v308 = vpop.f32.mrf.mxu0
    %v309 = vadd.f32 %v135, %v308
    %310 = vmatprep.mubr.f32.mxu0 0.0
    %311 = vmatmul.mubr.f32.gmra.mxu0 %v80
    %v312 = vpop.f32.mrf.mxu0
    %v313 = vadd.f32 %v131, %v312
    %v314 = vpop.f32.mrf.mxu0
    %v315 = vadd.f32 %v135, %v314
    %316 = vmatprep.mubr.f32.mxu0 0.0
    %317 = vmatmul.mubr.f32.gmra.mxu0 %v81
    %v318 = vpop.f32.mrf.mxu0
    %v319 = vadd.f32 %v131, %v318
    %v320 = vpop.f32.mrf.mxu0
    %v321 = vadd.f32 %v135, %v320
    %322 = vmatprep.mubr.f32.mxu0 0.0
    %323 = vmatmul.mubr.f32.gmra.mxu0 %v82
    %v324 = vpop.f32.mrf.mxu0
    %v325 = vadd.f32 %v131, %v324
    %v326 = vpop.f32.mrf.mxu0
    %v327 = vadd.f32 %v135, %v326
    %328 = vmatprep.mubr.f32.mxu0 0.0
    %329 = vmatmul.mubr.f32.gmra.mxu0 %v83
    %v330 = vpop.f32.mrf.mxu0
    %v331 = vadd.f32 %v131, %v330
    %v332 = vpop.f32.mrf.mxu0
    %v333 = vadd.f32 %v135, %v332
    %334 = vmatprep.mubr.f32.mxu0 0.0
    %335 = vmatmul.mubr.f32.gmra.mxu0 %v84
    %v336 = vpop.f32.mrf.mxu0
    %v337 = vadd.f32 %v131, %v336
    %v338 = vpop.f32.mrf.mxu0
    %v339 = vadd.f32 %v135, %v338
    %340 = vmatprep.mubr.f32.mxu0 0.0
    %341 = vmatmul.mubr.f32.gmra.mxu0 %v85
    %v342 = vpop.f32.mrf.mxu0
    %v343 = vadd.f32 %v131, %v342
    %v344 = vpop.f32.mrf.mxu0
    %v345 = vadd.f32 %v135, %v344
    %346 = vmatprep.mubr.f32.mxu0 0.0
    %347 = vmatmul.mubr.f32.gmra.mxu0 %v86
    %v348 = vpop.f32.mrf.mxu0
    %v349 = vadd.f32 %v131, %v348
    %v350 = vpop.f32.mrf.mxu0
    %v351 = vadd.f32 %v135, %v350
    %352 = vmatprep.mubr.f32.mxu0 0.0
    %353 = vmatmul.mubr.f32.gmra.mxu0 %v87
    %v354 = vpop.f32.mrf.mxu0
    %v355 = vadd.f32 %v131, %v354
    %v356 = vpop.f32.mrf.mxu0
    %v357 = vadd.f32 %v135, %v356
    %358 = vmatprep.mubr.f32.mxu0 0.0
    %359 = vmatmul.mubr.f32.gmra.mxu0 %v88
    %v360 = vpop.f32.mrf.mxu0
    %v361 = vadd.f32 %v131, %v360
    %v362 = vpop.f32.mrf.mxu0
    %v363 = vadd.f32 %v135, %v362
    %364 = vmatprep.mubr.f32.mxu0 0.0
    %365 = vmatmul.mubr.f32.gmra.mxu0 %v89
    %v366 = vpop.f32.mrf.mxu0
    %v367 = vadd.f32 %v131, %v366
    %v368 = vpop.f32.mrf.mxu0
    %v369 = vadd.f32 %v135, %v368
    %370 = vmatprep.mubr.f32.mxu0 0.0
    %371 = vmatmul.mubr.f32.gmra.mxu0 %v90
    %v372 = vpop.f32.mrf.mxu0
    %v373 = vadd.f32 %v131, %v372
    %v374 = vpop.f32.mrf.mxu0
    %v375 = vadd.f32 %v135, %v374
    %376 = vmatprep.mubr.f32.mxu0 0.0
    %377 = vmatmul.mubr.f32.gmra.mxu0 %v91
    %v378 = vpop.f32.mrf.mxu0
    %v379 = vadd.f32 %v131, %v378
    %v380 = vpop.f32.mrf.mxu0
    %v381 = vadd.f32 %v135, %v380
    %382 = vmatprep.mubr.f32.mxu0 0.0
    %383 = vmatmul.mubr.f32.gmra.mxu0 %v92
    %v384 = vpop.f32.mrf.mxu0
    %v385 = vadd.f32 %v131, %v384
    %v386 = vpop.f32.mrf.mxu0
    %v387 = vadd.f32 %v135, %v386
    %388 = vmatprep.mubr.f32.mxu0 0.0
    %389 = vmatmul.mubr.f32.gmra.mxu0 %v93
    %v390 = vpop.f32.mrf.mxu0
    %v391 = vadd.f32 %v131, %v390
    %v392 = vpop.f32.mrf.mxu0
    %v393 = vadd.f32 %v135, %v392
    %394 = vdwg.mxu0
    %v395 = vmax.f32 %v205, 0.0
    %v396 = vmax.f32 %v207, 0.0
    %v397 = vmax.f32 %v211, 0.0
    %v398 = vmax.f32 %v213, 0.0
    %v399 = vmax.f32 %v217, 0.0
    %v400 = vmax.f32 %v219, 0.0
    %v401 = vmax.f32 %v223, 0.0
    %v402 = vmax.f32 %v225, 0.0
    %v403 = vmax.f32 %v229, 0.0
    %v404 = vmax.f32 %v231, 0.0
    %v405 = vmax.f32 %v235, 0.0
    %v406 = vmax.f32 %v237, 0.0
    %v407 = vmax.f32 %v241, 0.0
    %v408 = vmax.f32 %v243, 0.0
    %v409 = vmax.f32 %v247, 0.0
    %v410 = vmax.f32 %v249, 0.0
    %v411 = vmax.f32 %v253, 0.0
    %v412 = vmax.f32 %v255, 0.0
    %v413 = vmax.f32 %v259, 0.0
    %v414 = vmax.f32 %v261, 0.0
    %v415 = vmax.f32 %v265, 0.0
    %v416 = vmax.f32 %v267, 0.0
    %v417 = vmax.f32 %v271, 0.0
    %v418 = vmax.f32 %v273, 0.0
    %v419 = vmax.f32 %v277, 0.0
    %v420 = vmax.f32 %v279, 0.0
    %v421 = vmax.f32 %v283, 0.0
    %v422 = vmax.f32 %v285, 0.0
    %v423 = vmax.f32 %v289, 0.0
    %v424 = vmax.f32 %v291, 0.0
    %v425 = vmax.f32 %v295, 0.0
    %v426 = vmax.f32 %v297, 0.0
    %v427 = vmax.f32 %v301, 0.0
    %v428 = vmax.f32 %v303, 0.0
    %v429 = vmax.f32 %v307, 0.0
    %v430 = vmax.f32 %v309, 0.0
    %v431 = vmax.f32 %v313, 0.0
    %v432 = vmax.f32 %v315, 0.0
    %v433 = vmax.f32 %v319, 0.0
    %v434 = vmax.f32 %v321, 0.0
    %v435 = vmax.f32 %v325, 0.0
    %v436 = vmax.f32 %v327, 0.0
    %v437 = vmax.f32 %v331, 0.0
    %v438 = vmax.f32 %v333, 0.0
    %v439 = vmax.f32 %v337, 0.0
    %v440 = vmax.f32 %v339, 0.0
    %v441 = vmax.f32 %v343, 0.0
    %v442 = vmax.f32 %v345, 0.0
    %v443 = vmax.f32 %v349, 0.0
    %v444 = vmax.f32 %v351, 0.0
    %v445 = vmax.f32 %v355, 0.0
    %v446 = vmax.f32 %v357, 0.0
    %v447 = vmax.f32 %v361, 0.0
    %v448 = vmax.f32 %v363, 0.0
    %v449 = vmax.f32 %v367, 0.0
    %v450 = vmax.f32 %v369, 0.0
    %v451 = vmax.f32 %v373, 0.0
    %v452 = vmax.f32 %v375, 0.0
    %v453 = vmax.f32 %v379, 0.0
    %v454 = vmax.f32 %v381, 0.0
    %v455 = vmax.f32 %v385, 0.0
    %v456 = vmax.f32 %v387, 0.0
    %v457 = vmax.f32 %v391, 0.0
    %v458 = vmax.f32 %v393, 0.0
    %v459 = vld [vmem:[#allocation8] sm:$0xff]
    %v460 = vld [vmem:[#allocation8 + $0x8] sm:$0xff]
    %v461 = vld [vmem:[#allocation8 + $0x10] sm:$0xff]
    %v462 = vld [vmem:[#allocation8 + $0x18] sm:$0xff]
    %v463 = vld [vmem:[#allocation8 + $0x20] sm:$0xff]
    %v464 = vld [vmem:[#allocation8 + $0x28] sm:$0xff]
    %v465 = vld [vmem:[#allocation8 + $0x30] sm:$0xff]
    %v466 = vld [vmem:[#allocation8 + $0x38] sm:$0xff]
    %v467 = vld [vmem:[#allocation8 + $0x40] sm:$0xff]
    %v468 = vld [vmem:[#allocation8 + $0x48] sm:$0xff]
    %v469 = vld [vmem:[#allocation8 + $0x50] sm:$0xff]
    %v470 = vld [vmem:[#allocation8 + $0x58] sm:$0xff]
    %v471 = vld [vmem:[#allocation8 + $0x60] sm:$0xff]
    %v472 = vld [vmem:[#allocation8 + $0x68] sm:$0xff]
    %v473 = vld [vmem:[#allocation8 + $0x70] sm:$0xff]
    %v474 = vld [vmem:[#allocation8 + $0x78] sm:$0xff]
    %v475 = vld [vmem:[#allocation8 + $0x80] sm:$0xff]
    %v476 = vld [vmem:[#allocation8 + $0x88] sm:$0xff]
    %v477 = vld [vmem:[#allocation8 + $0x90] sm:$0xff]
    %v478 = vld [vmem:[#allocation8 + $0x98] sm:$0xff]
    %v479 = vld [vmem:[#allocation8 + $0xa0] sm:$0xff]
    %v480 = vld [vmem:[#allocation8 + $0xa8] sm:$0xff]
    %v481 = vld [vmem:[#allocation8 + $0xb0] sm:$0xff]
    %v482 = vld [vmem:[#allocation8 + $0xb8] sm:$0xff]
    %v483 = vld [vmem:[#allocation8 + $0xc0] sm:$0xff]
    %v484 = vld [vmem:[#allocation8 + $0xc8] sm:$0xff]
    %v485 = vld [vmem:[#allocation8 + $0xd0] sm:$0xff]
    %v486 = vld [vmem:[#allocation8 + $0xd8] sm:$0xff]
    %v487 = vld [vmem:[#allocation8 + $0xe0] sm:$0xff]
    %v488 = vld [vmem:[#allocation8 + $0xe8] sm:$0xff]
    %v489 = vld [vmem:[#allocation8 + $0xf0] sm:$0xff]
    %v490 = vld [vmem:[#allocation8 + $0xf8] sm:$0xff]
    %491 = vmatprep.subr.mxu0 0.0
    %492 = vmatpush1.msra.mxu0 %v474
    %493 = vmatprep.subr.mxu0 0.0
    %494 = vmatpush1.msra.mxu0 %v473
    %495 = vmatprep.subr.mxu0 0.0
    %496 = vmatpush1.msra.mxu0 %v472
    %497 = vmatprep.subr.mxu0 0.0
    %498 = vmatpush1.msra.mxu0 %v471
    %499 = vmatprep.subr.mxu0 0.0
    %500 = vmatpush1.msra.mxu0 %v470
    %501 = vmatprep.subr.mxu0 0.0
    %502 = vmatpush1.msra.mxu0 %v469
    %503 = vmatprep.subr.mxu0 0.0
    %504 = vmatpush1.msra.mxu0 %v468
    %505 = vmatprep.subr.mxu0 0.0
    %506 = vmatpush1.msra.mxu0 %v467
    %507 = vmatprep.subr.mxu0 0.0
    %508 = vmatpush1.msra.mxu0 %v466
    %509 = vmatprep.subr.mxu0 0.0
    %510 = vmatpush1.msra.mxu0 %v465
    %511 = vmatprep.subr.mxu0 0.0
    %512 = vmatpush1.msra.mxu0 %v464
    %513 = vmatprep.subr.mxu0 0.0
    %514 = vmatpush1.msra.mxu0 %v463
    %515 = vmatprep.subr.mxu0 0.0
    %516 = vmatpush1.msra.mxu0 %v462
    %517 = vmatprep.subr.mxu0 0.0
    %518 = vmatpush1.msra.mxu0 %v461
    %519 = vmatprep.subr.mxu0 0.0
    %520 = vmatpush1.msra.mxu0 %v460
    %521 = vmatprep.subr.mxu0 0.0
    %522 = vmatpush1.msra.mxu0 %v459
    %523 = vmatprep.subr.mxu0 0.0
    %524 = vmatpush2.msra.mxu0 %v490
    %525 = vmatprep.subr.mxu0 0.0
    %526 = vmatpush2.msra.mxu0 %v489
    %527 = vmatprep.subr.mxu0 0.0
    %528 = vmatpush2.msra.mxu0 %v488
    %529 = vmatprep.subr.mxu0 0.0
    %530 = vmatpush2.msra.mxu0 %v487
    %531 = vmatprep.subr.mxu0 0.0
    %532 = vmatpush2.msra.mxu0 %v486
    %533 = vmatprep.subr.mxu0 0.0
    %534 = vmatpush2.msra.mxu0 %v485
    %535 = vmatprep.subr.mxu0 0.0
    %536 = vmatpush2.msra.mxu0 %v484
    %537 = vmatprep.subr.mxu0 0.0
    %538 = vmatpush2.msra.mxu0 %v483
    %539 = vmatprep.subr.mxu0 0.0
    %540 = vmatpush2.msra.mxu0 %v482
    %541 = vmatprep.subr.mxu0 0.0
    %542 = vmatpush2.msra.mxu0 %v481
    %543 = vmatprep.subr.mxu0 0.0
    %544 = vmatpush2.msra.mxu0 %v480
    %545 = vmatprep.subr.mxu0 0.0
    %546 = vmatpush2.msra.mxu0 %v479
    %547 = vmatprep.subr.mxu0 0.0
    %548 = vmatpush2.msra.mxu0 %v478
    %549 = vmatprep.subr.mxu0 0.0
    %550 = vmatpush2.msra.mxu0 %v477
    %551 = vmatprep.subr.mxu0 0.0
    %552 = vmatpush2.msra.mxu0 %v476
    %553 = vmatprep.subr.mxu0 0.0
    %554 = vmatpush2.msra.mxu0 %v475
    %555 = vmatprep.mubr.f32.mxu0 %v396
    %556 = vmatmul.mubr.f32.gmra.mxu0 %v395
    %v557 = vpop.f32.mrf.mxu0
    %v558 = vadd.f32 0.0, %v557
    %v559 = vpop.f32.mrf.mxu0
    %560 = vmatprep.mubr.f32.mxu0 %v398
    %561 = vmatmul.mubr.f32.gmra.mxu0 %v397
    %v562 = vpop.f32.mrf.mxu0
    %v563 = vadd.f32 0.0, %v562
    %v564 = vpop.f32.mrf.mxu0
    %565 = vmatprep.mubr.f32.mxu0 %v400
    %566 = vmatmul.mubr.f32.gmra.mxu0 %v399
    %v567 = vpop.f32.mrf.mxu0
    %v568 = vadd.f32 0.0, %v567
    %v569 = vpop.f32.mrf.mxu0
    %570 = vmatprep.mubr.f32.mxu0 %v402
    %571 = vmatmul.mubr.f32.gmra.mxu0 %v401
    %v572 = vpop.f32.mrf.mxu0
    %v573 = vadd.f32 0.0, %v572
    %v574 = vpop.f32.mrf.mxu0
    %575 = vmatprep.mubr.f32.mxu0 %v404
    %576 = vmatmul.mubr.f32.gmra.mxu0 %v403
    %v577 = vpop.f32.mrf.mxu0
    %v578 = vadd.f32 0.0, %v577
    %v579 = vpop.f32.mrf.mxu0
    %580 = vmatprep.mubr.f32.mxu0 %v406
    %581 = vmatmul.mubr.f32.gmra.mxu0 %v405
    %v582 = vpop.f32.mrf.mxu0
    %v583 = vadd.f32 0.0, %v582
    %v584 = vpop.f32.mrf.mxu0
    %585 = vmatprep.mubr.f32.mxu0 %v408
    %586 = vmatmul.mubr.f32.gmra.mxu0 %v407
    %v587 = vpop.f32.mrf.mxu0
    %v588 = vadd.f32 0.0, %v587
    %v589 = vpop.f32.mrf.mxu0
    %590 = vmatprep.mubr.f32.mxu0 %v410
    %591 = vmatmul.mubr.f32.gmra.mxu0 %v409
    %v592 = vpop.f32.mrf.mxu0
    %v593 = vadd.f32 0.0, %v592
    %v594 = vpop.f32.mrf.mxu0
    %595 = vmatprep.mubr.f32.mxu0 %v412
    %596 = vmatmul.mubr.f32.gmra.mxu0 %v411
    %v597 = vpop.f32.mrf.mxu0
    %v598 = vadd.f32 0.0, %v597
    %v599 = vpop.f32.mrf.mxu0
    %600 = vmatprep.mubr.f32.mxu0 %v414
    %601 = vmatmul.mubr.f32.gmra.mxu0 %v413
    %v602 = vpop.f32.mrf.mxu0
    %v603 = vadd.f32 0.0, %v602
    %v604 = vpop.f32.mrf.mxu0
    %605 = vmatprep.mubr.f32.mxu0 %v416
    %606 = vmatmul.mubr.f32.gmra.mxu0 %v415
    %v607 = vpop.f32.mrf.mxu0
    %v608 = vadd.f32 0.0, %v607
    %v609 = vpop.f32.mrf.mxu0
    %610 = vmatprep.mubr.f32.mxu0 %v418
    %611 = vmatmul.mubr.f32.gmra.mxu0 %v417
    %v612 = vpop.f32.mrf.mxu0
    %v613 = vadd.f32 0.0, %v612
    %v614 = vpop.f32.mrf.mxu0
    %615 = vmatprep.mubr.f32.mxu0 %v420
    %616 = vmatmul.mubr.f32.gmra.mxu0 %v419
    %v617 = vpop.f32.mrf.mxu0
    %v618 = vadd.f32 0.0, %v617
    %v619 = vpop.f32.mrf.mxu0
    %620 = vmatprep.mubr.f32.mxu0 %v422
    %621 = vmatmul.mubr.f32.gmra.mxu0 %v421
    %v622 = vpop.f32.mrf.mxu0
    %v623 = vadd.f32 0.0, %v622
    %v624 = vpop.f32.mrf.mxu0
    %625 = vmatprep.mubr.f32.mxu0 %v424
    %626 = vmatmul.mubr.f32.gmra.mxu0 %v423
    %v627 = vpop.f32.mrf.mxu0
    %v628 = vadd.f32 0.0, %v627
    %v629 = vpop.f32.mrf.mxu0
    %630 = vmatprep.mubr.f32.mxu0 %v426
    %631 = vmatmul.mubr.f32.gmra.mxu0 %v425
    %v632 = vpop.f32.mrf.mxu0
    %v633 = vadd.f32 0.0, %v632
    %v634 = vpop.f32.mrf.mxu0
    %635 = vmatprep.mubr.f32.mxu0 %v428
    %636 = vmatmul.mubr.f32.gmra.mxu0 %v427
    %v637 = vpop.f32.mrf.mxu0
    %v638 = vadd.f32 0.0, %v637
    %v639 = vpop.f32.mrf.mxu0
    %640 = vmatprep.mubr.f32.mxu0 %v430
    %641 = vmatmul.mubr.f32.gmra.mxu0 %v429
    %v642 = vpop.f32.mrf.mxu0
    %v643 = vadd.f32 0.0, %v642
    %v644 = vpop.f32.mrf.mxu0
    %645 = vmatprep.mubr.f32.mxu0 %v432
    %646 = vmatmul.mubr.f32.gmra.mxu0 %v431
    %v647 = vpop.f32.mrf.mxu0
    %v648 = vadd.f32 0.0, %v647
    %v649 = vpop.f32.mrf.mxu0
    %650 = vmatprep.mubr.f32.mxu0 %v434
    %651 = vmatmul.mubr.f32.gmra.mxu0 %v433
    %v652 = vpop.f32.mrf.mxu0
    %v653 = vadd.f32 0.0, %v652
    %v654 = vpop.f32.mrf.mxu0
    %655 = vmatprep.mubr.f32.mxu0 %v436
    %656 = vmatmul.mubr.f32.gmra.mxu0 %v435
    %v657 = vpop.f32.mrf.mxu0
    %v658 = vadd.f32 0.0, %v657
    %v659 = vpop.f32.mrf.mxu0
    %660 = vmatprep.mubr.f32.mxu0 %v438
    %661 = vmatmul.mubr.f32.gmra.mxu0 %v437
    %v662 = vpop.f32.mrf.mxu0
    %v663 = vadd.f32 0.0, %v662
    %v664 = vpop.f32.mrf.mxu0
    %665 = vmatprep.mubr.f32.mxu0 %v440
    %666 = vmatmul.mubr.f32.gmra.mxu0 %v439
    %v667 = vpop.f32.mrf.mxu0
    %v668 = vadd.f32 0.0, %v667
    %v669 = vpop.f32.mrf.mxu0
    %670 = vmatprep.mubr.f32.mxu0 %v442
    %671 = vmatmul.mubr.f32.gmra.mxu0 %v441
    %v672 = vpop.f32.mrf.mxu0
    %v673 = vadd.f32 0.0, %v672
    %v674 = vpop.f32.mrf.mxu0
    %675 = vmatprep.mubr.f32.mxu0 %v444
    %676 = vmatmul.mubr.f32.gmra.mxu0 %v443
    %v677 = vpop.f32.mrf.mxu0
    %v678 = vadd.f32 0.0, %v677
    %v679 = vpop.f32.mrf.mxu0
    %680 = vmatprep.mubr.f32.mxu0 %v446
    %681 = vmatmul.mubr.f32.gmra.mxu0 %v445
    %v682 = vpop.f32.mrf.mxu0
    %v683 = vadd.f32 0.0, %v682
    %v684 = vpop.f32.mrf.mxu0
    %685 = vmatprep.mubr.f32.mxu0 %v448
    %686 = vmatmul.mubr.f32.gmra.mxu0 %v447
    %v687 = vpop.f32.mrf.mxu0
    %v688 = vadd.f32 0.0, %v687
    %v689 = vpop.f32.mrf.mxu0
    %690 = vmatprep.mubr.f32.mxu0 %v450
    %691 = vmatmul.mubr.f32.gmra.mxu0 %v449
    %v692 = vpop.f32.mrf.mxu0
    %v693 = vadd.f32 0.0, %v692
    %v694 = vpop.f32.mrf.mxu0
    %695 = vmatprep.mubr.f32.mxu0 %v452
    %696 = vmatmul.mubr.f32.gmra.mxu0 %v451
    %v697 = vpop.f32.mrf.mxu0
    %v698 = vadd.f32 0.0, %v697
    %v699 = vpop.f32.mrf.mxu0
    %700 = vmatprep.mubr.f32.mxu0 %v454
    %701 = vmatmul.mubr.f32.gmra.mxu0 %v453
    %v702 = vpop.f32.mrf.mxu0
    %v703 = vadd.f32 0.0, %v702
    %v704 = vpop.f32.mrf.mxu0
    %705 = vmatprep.mubr.f32.mxu0 %v456
    %706 = vmatmul.mubr.f32.gmra.mxu0 %v455
    %v707 = vpop.f32.mrf.mxu0
    %v708 = vadd.f32 0.0, %v707
    %v709 = vpop.f32.mrf.mxu0
    %710 = vmatprep.mubr.f32.mxu0 %v458
    %711 = vmatmul.mubr.f32.gmra.mxu0 %v457
    %v712 = vpop.f32.mrf.mxu0
    %v713 = vadd.f32 0.0, %v712
    %v714 = vpop.f32.mrf.mxu0
    %715 = vdwg.mxu0
    %p716 = scmp.eq.s32.totalorder 0, 0
    // Predicated region
    $region34: #{tpu_custom_call.1} parent=1 // pred_check
      %p717 = pneg %p716
    $region35: #{tpu_custom_call.1} parent=1 // pred_check_branch
      %719 = sbr.rel (%p717) target = $region37
    $region36: #{tpu_custom_call.1} parent=1 // pred_region
      %v720 = vld [vmem:[%s4] sm:$0x1]
      %v722 = vlaneseq
      %v723 = vshrl.u32 %v722, 7
      %v724 = vsub.s32 0, %v723
      %v725 = vrot.slane %v720, %v724
      %v727 = vadd.f32 %v558, %v725
      %v728 = vadd.f32 %v563, %v725
      %v729 = vadd.f32 %v568, %v725
      %v730 = vadd.f32 %v573, %v725
      %v731 = vadd.f32 %v578, %v725
      %v732 = vadd.f32 %v583, %v725
      %v733 = vadd.f32 %v588, %v725
      %v734 = vadd.f32 %v593, %v725
      %v735 = vadd.f32 %v598, %v725
      %v736 = vadd.f32 %v603, %v725
      %v737 = vadd.f32 %v608, %v725
      %v738 = vadd.f32 %v613, %v725
      %v739 = vadd.f32 %v618, %v725
      %v740 = vadd.f32 %v623, %v725
      %v741 = vadd.f32 %v628, %v725
      %v742 = vadd.f32 %v633, %v725
      %v743 = vadd.f32 %v638, %v725
      %v744 = vadd.f32 %v643, %v725
      %v745 = vadd.f32 %v648, %v725
      %v746 = vadd.f32 %v653, %v725
      %v747 = vadd.f32 %v658, %v725
      %v748 = vadd.f32 %v663, %v725
      %v749 = vadd.f32 %v668, %v725
      %v750 = vadd.f32 %v673, %v725
      %v751 = vadd.f32 %v678, %v725
      %v752 = vadd.f32 %v683, %v725
      %v753 = vadd.f32 %v688, %v725
      %v754 = vadd.f32 %v693, %v725
      %v755 = vadd.f32 %v698, %v725
      %v756 = vadd.f32 %v703, %v725
      %v757 = vadd.f32 %v708, %v725
      %v758 = vadd.f32 %v713, %v725
      %759 = vst [vmem:[#allocation2] sm:$0xff] %v727
      %760 = vst [vmem:[#allocation2 + $0x8] sm:$0xff] %v728
      %761 = vst [vmem:[#allocation2 + $0x10] sm:$0xff] %v729
      %762 = vst [vmem:[#allocation2 + $0x18] sm:$0xff] %v730
      %763 = vst [vmem:[#allocation2 + $0x20] sm:$0xff] %v731
      %764 = vst [vmem:[#allocation2 + $0x28] sm:$0xff] %v732
      %765 = vst [vmem:[#allocation2 + $0x30] sm:$0xff] %v733
      %766 = vst [vmem:[#allocation2 + $0x38] sm:$0xff] %v734
      %767 = vst [vmem:[#allocation2 + $0x40] sm:$0xff] %v735
      %768 = vst [vmem:[#allocation2 + $0x48] sm:$0xff] %v736
      %769 = vst [vmem:[#allocation2 + $0x50] sm:$0xff] %v737
      %770 = vst [vmem:[#allocation2 + $0x58] sm:$0xff] %v738
      %771 = vst [vmem:[#allocation2 + $0x60] sm:$0xff] %v739
      %772 = vst [vmem:[#allocation2 + $0x68] sm:$0xff] %v740
      %773 = vst [vmem:[#allocation2 + $0x70] sm:$0xff] %v741
      %774 = vst [vmem:[#allocation2 + $0x78] sm:$0xff] %v742
      %775 = vst [vmem:[#allocation2 + $0x80] sm:$0xff] %v743
      %776 = vst [vmem:[#allocation2 + $0x88] sm:$0xff] %v744
      %777 = vst [vmem:[#allocation2 + $0x90] sm:$0xff] %v745
      %778 = vst [vmem:[#allocation2 + $0x98] sm:$0xff] %v746
      %779 = vst [vmem:[#allocation2 + $0xa0] sm:$0xff] %v747
      %780 = vst [vmem:[#allocation2 + $0xa8] sm:$0xff] %v748
      %781 = vst [vmem:[#allocation2 + $0xb0] sm:$0xff] %v749
      %782 = vst [vmem:[#allocation2 + $0xb8] sm:$0xff] %v750
      %783 = vst [vmem:[#allocation2 + $0xc0] sm:$0xff] %v751
      %784 = vst [vmem:[#allocation2 + $0xc8] sm:$0xff] %v752
      %785 = vst [vmem:[#allocation2 + $0xd0] sm:$0xff] %v753
      %786 = vst [vmem:[#allocation2 + $0xd8] sm:$0xff] %v754
      %787 = vst [vmem:[#allocation2 + $0xe0] sm:$0xff] %v755
      %788 = vst [vmem:[#allocation2 + $0xe8] sm:$0xff] %v756
      %789 = vst [vmem:[#allocation2 + $0xf0] sm:$0xff] %v757
      %790 = vst [vmem:[#allocation2 + $0xf8] sm:$0xff] %v758
    $region37: #{tpu_custom_call.1} parent=1 // pred_fallthru
      _
    %p791 = scmp.ne.s32.totalorder 0, 0
    // Predicated region
    $region38: #{tpu_custom_call.1} parent=1 // pred_check
      %p792 = pneg %p791
    $region39: #{tpu_custom_call.1} parent=1 // pred_check_branch
      %794 = sbr.rel (%p792) target = $region41
    $region40: #{tpu_custom_call.1} parent=1 // pred_region
      %v795 = vld [vmem:[#allocation2] sm:$0xff]
      %v796 = vld [vmem:[#allocation2 + $0x8] sm:$0xff]
      %v797 = vld [vmem:[#allocation2 + $0x10] sm:$0xff]
      %v798 = vld [vmem:[#allocation2 + $0x18] sm:$0xff]
      %v799 = vld [vmem:[#allocation2 + $0x20] sm:$0xff]
      %v800 = vld [vmem:[#allocation2 + $0x28] sm:$0xff]
      %v801 = vld [vmem:[#allocation2 + $0x30] sm:$0xff]
      %v802 = vld [vmem:[#allocation2 + $0x38] sm:$0xff]
      %v803 = vld [vmem:[#allocation2 + $0x40] sm:$0xff]
      %v804 = vld [vmem:[#allocation2 + $0x48] sm:$0xff]
      %v805 = vld [vmem:[#allocation2 + $0x50] sm:$0xff]
      %v806 = vld [vmem:[#allocation2 + $0x58] sm:$0xff]
      %v807 = vld [vmem:[#allocation2 + $0x60] sm:$0xff]
      %v808 = vld [vmem:[#allocation2 + $0x68] sm:$0xff]
      %v809 = vld [vmem:[#allocation2 + $0x70] sm:$0xff]
      %v810 = vld [vmem:[#allocation2 + $0x78] sm:$0xff]
      %v811 = vld [vmem:[#allocation2 + $0x80] sm:$0xff]
      %v812 = vld [vmem:[#allocation2 + $0x88] sm:$0xff]
      %v813 = vld [vmem:[#allocation2 + $0x90] sm:$0xff]
      %v814 = vld [vmem:[#allocation2 + $0x98] sm:$0xff]
      %v815 = vld [vmem:[#allocation2 + $0xa0] sm:$0xff]
      %v816 = vld [vmem:[#allocation2 + $0xa8] sm:$0xff]
      %v817 = vld [vmem:[#allocation2 + $0xb0] sm:$0xff]
      %v818 = vld [vmem:[#allocation2 + $0xb8] sm:$0xff]
      %v819 = vld [vmem:[#allocation2 + $0xc0] sm:$0xff]
      %v820 = vld [vmem:[#allocation2 + $0xc8] sm:$0xff]
      %v821 = vld [vmem:[#allocation2 + $0xd0] sm:$0xff]
      %v822 = vld [vmem:[#allocation2 + $0xd8] sm:$0xff]
      %v823 = vld [vmem:[#allocation2 + $0xe0] sm:$0xff]
      %v824 = vld [vmem:[#allocation2 + $0xe8] sm:$0xff]
      %v825 = vld [vmem:[#allocation2 + $0xf0] sm:$0xff]
      %v826 = vld [vmem:[#allocation2 + $0xf8] sm:$0xff]
      %v827 = vadd.f32 %v795, %v558
      %v828 = vadd.f32 %v796, %v563
      %v829 = vadd.f32 %v797, %v568
      %v830 = vadd.f32 %v798, %v573
      %v831 = vadd.f32 %v799, %v578
      %v832 = vadd.f32 %v800, %v583
      %v833 = vadd.f32 %v801, %v588
      %v834 = vadd.f32 %v802, %v593
      %v835 = vadd.f32 %v803, %v598
      %v836 = vadd.f32 %v804, %v603
      %v837 = vadd.f32 %v805, %v608
      %v838 = vadd.f32 %v806, %v613
      %v839 = vadd.f32 %v807, %v618
      %v840 = vadd.f32 %v808, %v623
      %v841 = vadd.f32 %v809, %v628
      %v842 = vadd.f32 %v810, %v633
      %v843 = vadd.f32 %v811, %v638
      %v844 = vadd.f32 %v812, %v643
      %v845 = vadd.f32 %v813, %v648
      %v846 = vadd.f32 %v814, %v653
      %v847 = vadd.f32 %v815, %v658
      %v848 = vadd.f32 %v816, %v663
      %v849 = vadd.f32 %v817, %v668
      %v850 = vadd.f32 %v818, %v673
      %v851 = vadd.f32 %v819, %v678
      %v852 = vadd.f32 %v820, %v683
      %v853 = vadd.f32 %v821, %v688
      %v854 = vadd.f32 %v822, %v693
      %v855 = vadd.f32 %v823, %v698
      %v856 = vadd.f32 %v824, %v703
      %v857 = vadd.f32 %v825, %v708
      %v858 = vadd.f32 %v826, %v713
      %859 = vst [vmem:[#allocation2] sm:$0xff] %v827
      %860 = vst [vmem:[#allocation2 + $0x8] sm:$0xff] %v828
      %861 = vst [vmem:[#allocation2 + $0x10] sm:$0xff] %v829
      %862 = vst [vmem:[#allocation2 + $0x18] sm:$0xff] %v830
      %863 = vst [vmem:[#allocation2 + $0x20] sm:$0xff] %v831
      %864 = vst [vmem:[#allocation2 + $0x28] sm:$0xff] %v832
      %865 = vst [vmem:[#allocation2 + $0x30] sm:$0xff] %v833
      %866 = vst [vmem:[#allocation2 + $0x38] sm:$0xff] %v834
      %867 = vst [vmem:[#allocation2 + $0x40] sm:$0xff] %v835
      %868 = vst [vmem:[#allocation2 + $0x48] sm:$0xff] %v836
      %869 = vst [vmem:[#allocation2 + $0x50] sm:$0xff] %v837
      %870 = vst [vmem:[#allocation2 + $0x58] sm:$0xff] %v838
      %871 = vst [vmem:[#allocation2 + $0x60] sm:$0xff] %v839
      %872 = vst [vmem:[#allocation2 + $0x68] sm:$0xff] %v840
      %873 = vst [vmem:[#allocation2 + $0x70] sm:$0xff] %v841
      %874 = vst [vmem:[#allocation2 + $0x78] sm:$0xff] %v842
      %875 = vst [vmem:[#allocation2 + $0x80] sm:$0xff] %v843
      %876 = vst [vmem:[#allocation2 + $0x88] sm:$0xff] %v844
      %877 = vst [vmem:[#allocation2 + $0x90] sm:$0xff] %v845
      %878 = vst [vmem:[#allocation2 + $0x98] sm:$0xff] %v846
      %879 = vst [vmem:[#allocation2 + $0xa0] sm:$0xff] %v847
      %880 = vst [vmem:[#allocation2 + $0xa8] sm:$0xff] %v848
      %881 = vst [vmem:[#allocation2 + $0xb0] sm:$0xff] %v849
      %882 = vst [vmem:[#allocation2 + $0xb8] sm:$0xff] %v850
      %883 = vst [vmem:[#allocation2 + $0xc0] sm:$0xff] %v851
      %884 = vst [vmem:[#allocation2 + $0xc8] sm:$0xff] %v852
      %885 = vst [vmem:[#allocation2 + $0xd0] sm:$0xff] %v853
      %886 = vst [vmem:[#allocation2 + $0xd8] sm:$0xff] %v854
      %887 = vst [vmem:[#allocation2 + $0xe0] sm:$0xff] %v855
      %888 = vst [vmem:[#allocation2 + $0xe8] sm:$0xff] %v856
      %889 = vst [vmem:[#allocation2 + $0xf0] sm:$0xff] %v857
      %890 = vst [vmem:[#allocation2 + $0xf8] sm:$0xff] %v858
    $region41: #{tpu_custom_call.1} parent=1 // pred_fallthru
      _
    // Predicated region
    $region42: #{tpu_custom_call.1} parent=1 // pred_check
      %p891 = pneg %p716
    $region43: #{tpu_custom_call.1} parent=1 // pred_check_branch
      %893 = sbr.rel (%p891) target = $region45
    $region44: #{tpu_custom_call.1} parent=1 // pred_region
      %v894 = vld [vmem:[#allocation2] sm:$0xff]
      %v895 = vld [vmem:[#allocation2 + $0x8] sm:$0xff]
      %v896 = vld [vmem:[#allocation2 + $0x10] sm:$0xff]
      %v897 = vld [vmem:[#allocation2 + $0x18] sm:$0xff]
      %v898 = vld [vmem:[#allocation2 + $0x20] sm:$0xff]
      %v899 = vld [vmem:[#allocation2 + $0x28] sm:$0xff]
      %v900 = vld [vmem:[#allocation2 + $0x30] sm:$0xff]
      %v901 = vld [vmem:[#allocation2 + $0x38] sm:$0xff]
      %v902 = vld [vmem:[#allocation2 + $0x40] sm:$0xff]
      %v903 = vld [vmem:[#allocation2 + $0x48] sm:$0xff]
      %v904 = vld [vmem:[#allocation2 + $0x50] sm:$0xff]
      %v905 = vld [vmem:[#allocation2 + $0x58] sm:$0xff]
      %v906 = vld [vmem:[#allocation2 + $0x60] sm:$0xff]
      %v907 = vld [vmem:[#allocation2 + $0x68] sm:$0xff]
      %v908 = vld [vmem:[#allocation2 + $0x70] sm:$0xff]
      %v909 = vld [vmem:[#allocation2 + $0x78] sm:$0xff]
      %v910 = vld [vmem:[#allocation2 + $0x80] sm:$0xff]
      %v911 = vld [vmem:[#allocation2 + $0x88] sm:$0xff]
      %v912 = vld [vmem:[#allocation2 + $0x90] sm:$0xff]
      %v913 = vld [vmem:[#allocation2 + $0x98] sm:$0xff]
      %v914 = vld [vmem:[#allocation2 + $0xa0] sm:$0xff]
      %v915 = vld [vmem:[#allocation2 + $0xa8] sm:$0xff]
      %v916 = vld [vmem:[#allocation2 + $0xb0] sm:$0xff]
      %v917 = vld [vmem:[#allocation2 + $0xb8] sm:$0xff]
      %v918 = vld [vmem:[#allocation2 + $0xc0] sm:$0xff]
      %v919 = vld [vmem:[#allocation2 + $0xc8] sm:$0xff]
      %v920 = vld [vmem:[#allocation2 + $0xd0] sm:$0xff]
      %v921 = vld [vmem:[#allocation2 + $0xd8] sm:$0xff]
      %v922 = vld [vmem:[#allocation2 + $0xe0] sm:$0xff]
      %v923 = vld [vmem:[#allocation2 + $0xe8] sm:$0xff]
      %v924 = vld [vmem:[#allocation2 + $0xf0] sm:$0xff]
      %v925 = vld [vmem:[#allocation2 + $0xf8] sm:$0xff]
      %926 = vst [vmem:[#allocation9] sm:$0xff] %v894
      %927 = vst [vmem:[#allocation9 + $0x8] sm:$0xff] %v895
      %928 = vst [vmem:[#allocation9 + $0x10] sm:$0xff] %v896
      %929 = vst [vmem:[#allocation9 + $0x18] sm:$0xff] %v897
      %930 = vst [vmem:[#allocation9 + $0x20] sm:$0xff] %v898
      %931 = vst [vmem:[#allocation9 + $0x28] sm:$0xff] %v899
      %932 = vst [vmem:[#allocation9 + $0x30] sm:$0xff] %v900
      %933 = vst [vmem:[#allocation9 + $0x38] sm:$0xff] %v901
      %934 = vst [vmem:[#allocation9 + $0x40] sm:$0xff] %v902
      %935 = vst [vmem:[#allocation9 + $0x48] sm:$0xff] %v903
      %936 = vst [vmem:[#allocation9 + $0x50] sm:$0xff] %v904
      %937 = vst [vmem:[#allocation9 + $0x58] sm:$0xff] %v905
      %938 = vst [vmem:[#allocation9 + $0x60] sm:$0xff] %v906
      %939 = vst [vmem:[#allocation9 + $0x68] sm:$0xff] %v907
      %940 = vst [vmem:[#allocation9 + $0x70] sm:$0xff] %v908
      %941 = vst [vmem:[#allocation9 + $0x78] sm:$0xff] %v909
      %942 = vst [vmem:[#allocation9 + $0x80] sm:$0xff] %v910
      %943 = vst [vmem:[#allocation9 + $0x88] sm:$0xff] %v911
      %944 = vst [vmem:[#allocation9 + $0x90] sm:$0xff] %v912
      %945 = vst [vmem:[#allocation9 + $0x98] sm:$0xff] %v913
      %946 = vst [vmem:[#allocation9 + $0xa0] sm:$0xff] %v914
      %947 = vst [vmem:[#allocation9 + $0xa8] sm:$0xff] %v915
      %948 = vst [vmem:[#allocation9 + $0xb0] sm:$0xff] %v916
      %949 = vst [vmem:[#allocation9 + $0xb8] sm:$0xff] %v917
      %950 = vst [vmem:[#allocation9 + $0xc0] sm:$0xff] %v918
      %951 = vst [vmem:[#allocation9 + $0xc8] sm:$0xff] %v919
      %952 = vst [vmem:[#allocation9 + $0xd0] sm:$0xff] %v920
      %953 = vst [vmem:[#allocation9 + $0xd8] sm:$0xff] %v921
      %954 = vst [vmem:[#allocation9 + $0xe0] sm:$0xff] %v922
      %955 = vst [vmem:[#allocation9 + $0xe8] sm:$0xff] %v923
      %956 = vst [vmem:[#allocation9 + $0xf0] sm:$0xff] %v924
      %957 = vst [vmem:[#allocation9 + $0xf8] sm:$0xff] %v925
    $region45: #{tpu_custom_call.1} parent=1 // pred_fallthru
      _
    // Predicated region
    $region46: #{tpu_custom_call.1} parent=1 // pred_check
      _
    $region47: #{tpu_custom_call.1} parent=1 // pred_check_branch
      %959 = sbr.rel (0) target = $region49
    $region48: #{tpu_custom_call.1} parent=1 // pred_region
      %s961 = ssub.s32 4096, 4096
      %962 = vsyncadd [#allocation5], %s961
      %s963 = sshll.u32 [#allocation9], 4
      %s964 = int_to_ptr.vmem [resolvable:$true] %s963
      %969 = dma.vmem_to_hbm [thread:$0]  %s964, 4096, %s5, [#allocation5], 128, 128, 8
    $region49: #{tpu_custom_call.1} parent=1 // pred_fallthru
      _
    // Predicated region
    $region50: #{tpu_custom_call.1} parent=1 // pred_check
      _
    $region51: #{tpu_custom_call.1} parent=1 // pred_check_branch
      %971 = sbr.rel (0) target = $region53
    $region52: #{tpu_custom_call.1} parent=1 // pred_region
      %972 = dma.done [#allocation5], 4096
    $region53: #{tpu_custom_call.1} parent=1 // pred_fallthru
      _
    %973 = vsyncpa [#allocation4], 1
    %974 = vsyncpa [#allocation7], 1
    %975 = vsyncpa [#allocation5], 1

</llo_original>
